<compile_context>
chip_gen: v6e
topology: v6e:2x2x1
jax: 0.10.0
libtpu: 0.0.40
codegen_flags: <defaults>
</compile_context>

<pallas_src>
import jax
import jax.numpy as jnp
from jax.experimental import pallas as pl
from jax.experimental.pallas import tpu as pltpu


# ----------------------------------------------------------------------------
# Kernel: out = w0*x + sum_l w_{l+1} * layer_l   (channel-window aware)
# ----------------------------------------------------------------------------
def _make_fusion_kernel(num_layer_inputs):
    """kernel(w_ref, x_ref, a_0, ..., a_{L-1}, o_ref).

    Blocks are (nb, C, r, lane).  x/out carry nx channels; layer l carries
    ce_l = min(na_l, nx) channels (its BlockSpec reads only that window).
    Accumulation is f32 (w_ref is f32, bf16 inputs promote); single store.
    """

    def kernel(w_ref, *refs):
        x_ref = refs[0]
        layer_refs = refs[1:1 + num_layer_inputs]
        o_ref = refs[1 + num_layer_inputs]
        nx = x_ref.shape[1]

        acc = w_ref[0] * x_ref[...]                      # f32 accumulator
        for l, a_ref in enumerate(layer_refs):
            contrib = w_ref[l + 1] * a_ref[...]
            ce = a_ref.shape[1]                          # = min(na_l, nx)
            if ce == nx:
                acc = acc + contrib
            else:
                # PyTorch `x[:, :na] += a`: only the first `ce` output channels
                # receive this layer; the rest pass through untouched.
                acc = jnp.concatenate([acc[:, :ce] + contrib, acc[:, ce:]],
                                      axis=1)
        o_ref[...] = acc.astype(o_ref.dtype)

    return kernel


# ----------------------------------------------------------------------------
# Layout / tiling heuristics
# ----------------------------------------------------------------------------
def _vmem_budget():
    """(streamed working-set target, vmem_limit_bytes), generation-aware."""
    cap = None
    try:
        cap = getattr(pltpu.get_tpu_info(), "vmem_capacity_bytes", None)
    except Exception:
        cap = None
    if not cap:
        cap = 64 * 1024 * 1024                 # conservative: v7x per-TC VMEM
    cap = max(32 * 1024 * 1024, min(int(cap), 128 * 1024 * 1024))
    limit = min((cap * 11) // 16, cap - 16 * 1024 * 1024)   # 64->44, 128->88
    working = (limit * 3) // 4                 # leave 25% for compiler scratch
    return working, limit


def _choose_spatial_layout(H, W):
    """Free reshape of (H, W) into (R, LANE) with LANE a multiple of 128."""
    M = H * W
    divisors = [l for l in range(128, min(2048, M) + 1, 128) if M % l == 0]
    if not divisors:
        # TODO(synk): H*W has no multiple-of-128 factor; keep the original
        # (H, W) layout (still tiled/pipelined; stores are lane-masked).
        # Padding W up to 128 would trade one pad copy for dense stores.
        return H, W
    deep = [l for l in divisors if M // l >= 8]      # >= 8 sublanes per slab
    lane = max(deep) if deep else min(divisors)
    return M // lane, lane


def _choose_row_block(R, bytes_per_row, sub_mult, step_budget, n_tiles_hint):
    """Rows per tile: multiple of sub_mult (or full R), budget-sized,
    preferring divisors of R and >= 2 / even total tile counts."""
    if R <= sub_mult:
        return R
    max_rows = min(R, max(sub_mult, step_budget // max(1, bytes_per_row)))
    if n_tiles_hint < 2 and R >= 2 * sub_mult:
        # guarantee >= 2 row tiles so both v7x TensorCores get work
        max_rows = min(max_rows, ((R // 2) // sub_mult) * sub_mult)
    max_rows = max(sub_mult, (max_rows // sub_mult) * sub_mult)
    if max_rows >= R:
        return R
    # TODO(synk): if even sub_mult rows overflow the budget (C*LANE enormous),
    # channel tiling would be needed; unrealistic for fusion layers, so skipped.
    best_div = best_even = None
    r = max_rows
    while r >= sub_mult:
        if R % r == 0:
            if best_div is None:
                best_div = r
            if (R // r) % 2 == 0:
                best_even = r
                break
        r -= sub_mult
    if best_div is None:
        return max_rows                        # ragged last tile (masked store)
    if n_tiles_hint % 2 == 1 and best_even is not None and best_even * 2 >= best_div:
        return best_even                       # even total tile count, cheap
    return best_div


def _choose_batch_block(N, r_tiles, per_step_bytes, step_budget):
    """Fold batches into one block only when R gives a single tile, keeping
    at least 2 grid steps (v7x split) and staying inside the step budget."""
    if N == 1 or r_tiles > 1:
        return 1
    best = 1
    for nb in range(2, N + 1):
        if N % nb == 0 and N // nb >= 2 and nb * per_step_bytes <= step_budget:
            best = nb
    return best


# ----------------------------------------------------------------------------
# Pallas entry point
# ----------------------------------------------------------------------------
def _fused_weighted_sum(weights, x4, layers4):
    """x4: (N, nx, R, LANE); layers4: list of (N, na_l, R, LANE) (originals,
    spatially reshaped only).  Returns (N, nx, R, LANE) in x4.dtype."""
    N, nx, R, LANE = x4.shape
    ces = [min(a.shape[1], nx) for a in layers4]     # channels actually read

    itemsizes = [x4.dtype.itemsize] + [a.dtype.itemsize for a in layers4]
    sub_mult = max(8 * max(1, 4 // s) for s in itemsizes)   # 8/16/32 sublanes

    working_set, vmem_limit = _vmem_budget()
    step_budget = working_set // 2                   # everything double-buffered

    # Bytes streamed per (single batch, single R-row): x block + out block +
    # only the valid channel window of every layer.
    bytes_per_row = 2 * nx * LANE * x4.dtype.itemsize
    for a, ce in zip(layers4, ces):
        bytes_per_row += ce * LANE * a.dtype.itemsize

    r_blk = _choose_row_block(R, bytes_per_row, sub_mult, step_budget, N)
    r_tiles = pl.cdiv(R, r_blk)
    nb = _choose_batch_block(N, r_tiles, r_blk * bytes_per_row, step_budget)
    n_tiles = N // nb
    grid = (n_tiles, r_tiles)

    def idx(n, r, w_ref):                            # w_ref: prefetched weights
        return (n, 0, r, 0)

    x_spec = pl.BlockSpec((nb, nx, r_blk, LANE), idx)
    layer_specs = [pl.BlockSpec((nb, ce, r_blk, LANE), idx) for ce in ces]

    elems_eff = N * R * LANE * (nx + sum(ces))
    bytes_eff = N * R * LANE * (2 * nx * x4.dtype.itemsize
                                + sum(ce * a.dtype.itemsize
                                      for a, ce in zip(layers4, ces)))
    cost = pl.CostEstimate(flops=2 * elems_eff, transcendentals=0,
                           bytes_accessed=bytes_eff)

    return pl.pallas_call(
        _make_fusion_kernel(len(layers4)),
        out_shape=jax.ShapeDtypeStruct((N, nx, R, LANE), x4.dtype),
        grid_spec=pltpu.PrefetchScalarGridSpec(
            num_scalar_prefetch=1,                   # weights -> SMEM
            grid=grid,
            in_specs=[x_spec] + layer_specs,
            out_specs=x_spec,
        ),
        compiler_params=pltpu.CompilerParams(
            dimension_semantics=("parallel", "parallel"),
            vmem_limit_bytes=vmem_limit,
        ),
        cost_estimate=cost,
    )(weights, x4, *layers4)


# ----------------------------------------------------------------------------
# Module-equivalent wrapper
# ----------------------------------------------------------------------------
def weight_feature_fusion(x, outputs, layers, w_param, weight=True):
    """JAX/Pallas equivalent of WeightFeatureFusion.forward.

    x       : (N, Cx, H, W) feature map (f32 or bf16)
    outputs : list of (N, Ci, H, W) feature maps (indexed by `layers`)
    layers  : list of int indices into `outputs`
    w_param : (len(layers)+1,) learnable weights (ignored if weight=False)
    Output keeps x.dtype; accumulation is f32 inside the kernel.
    """
    num_layers = len(layers) + 1
    if weight:
        wv = jax.nn.sigmoid(w_param.astype(jnp.float32)) * (2.0 / num_layers)
    else:
        wv = jnp.ones((num_layers,), jnp.float32)

    N, nx, H, W = x.shape
    R, LANE = _choose_spatial_layout(H, W)

    def spatial(a):                     # free reshape: (N,C,H,W) -> (N,C,R,LANE)
        return a.reshape(a.shape[0], a.shape[1], R, LANE)

    x4 = spatial(x)
    layers4 = [spatial(outputs[i]) for i in layers]   # originals, no pad/slice

    out4 = _fused_weighted_sum(wv, x4, layers4)
    return out4.reshape(N, nx, H, W)


# ----------------------------------------------------------------------------
# Pure-JAX reference (mirrors the PyTorch forward) for verification
# ----------------------------------------------------------------------------
def _reference(x, outputs, layers, w_param, weight=True):
    num_layers = len(layers) + 1
    if weight:
        wv = jax.nn.sigmoid(w_param.astype(jnp.float32)) * (2.0 / num_layers)
        x = x * wv[0]
    nx = x.shape[1]
    for i in range(num_layers - 1):
        a = outputs[layers[i]] * wv[i + 1] if weight else outputs[layers[i]]
        na = a.shape[1]
        if nx == na:
            x = x + a
        elif nx > na:
            x = x.at[:, :na].add(a)
        else:
            x = x + a[:, :nx]
    return x


if __name__ == "__main__":
    key = jax.random.PRNGKey(0)
    k0, k1, k2, k3 = jax.random.split(key, 4)

    N, C, Hs, Ws = 2, 4, 16, 16
    layers = [0, 1, 2]                 # -> num_layers = 4
    x = jax.random.normal(k0, (N, C, Hs, Ws), jnp.float32)
    outputs = [
        jax.random.normal(k1, (N, 4, Hs, Ws), jnp.float32),  # nx == na
        jax.random.normal(k2, (N, 2, Hs, Ws), jnp.float32),  # nx >  na (zero-extend)
        jax.random.normal(k3, (N, 6, Hs, Ws), jnp.float32),  # nx <  na (channel window)
    ]
    # PyTorch init: self.w = zeros(num_layers)  (deterministic)
    w_param = jnp.zeros((len(layers) + 1,), jnp.float32)

    # f32, weighted
    out = jax.block_until_ready(
        weight_feature_fusion(x, outputs, layers, w_param, weight=True))
    ref = _reference(x, outputs, layers, w_param, weight=True)
    assert out.shape == (N, C, Hs, Ws) and out.dtype == jnp.float32
    assert jnp.allclose(out, ref, atol=1e-5, rtol=1e-5)

    # f32, unweighted
    out_nw = jax.block_until_ready(
        weight_feature_fusion(x, outputs, layers, w_param, weight=False))
    ref_nw = _reference(x, outputs, layers, w_param, weight=False)
    assert jnp.allclose(out_nw, ref_nw, atol=1e-5, rtol=1e-5)

    # bf16 end-to-end (f32 accumulation in kernel, final cast to bf16)
    xb = x.astype(jnp.bfloat16)
    outb = [o.astype(jnp.bfloat16) for o in outputs]
    out_b = jax.block_until_ready(
        weight_feature_fusion(xb, outb, layers, w_param, weight=True))
    ref_b = _reference(xb, outb, layers, w_param, weight=True)  # promotes to f32
    assert out_b.dtype == jnp.bfloat16
    assert jnp.allclose(out_b.astype(jnp.float32),
                        jnp.asarray(ref_b, jnp.float32), atol=6e-2, rtol=6e-2)

    print("KERNEL_OK")
</pallas_src>

<mosaic_0001>
module attributes {stable_mosaic.version = 11 : i64} {
  func.func @kernel(%arg0: i32, %arg1: i32, %arg2: memref<4xf32, #tpu.memory_space<smem>>, %arg3: memref<1x4x2x128xf32, #tpu.memory_space<vmem>>, %arg4: memref<1x4x2x128xf32, #tpu.memory_space<vmem>>, %arg5: memref<1x2x2x128xf32, #tpu.memory_space<vmem>>, %arg6: memref<1x4x2x128xf32, #tpu.memory_space<vmem>>, %arg7: memref<1x4x2x128xf32, #tpu.memory_space<vmem>>) attributes {dimension_semantics = [#tpu.dimension_semantics<parallel>, #tpu.dimension_semantics<parallel>], iteration_bounds = array<i64: 2, 1>, scalar_prefetch = 1 : i64, scratch_operands = 0 : i64, tpu.core_type = #tpu.core_type<tc>, window_params = [{transform_indices = @transform_0, window_bounds = array<i64: 1, 4, 2, 128>}, {transform_indices = @transform_1, window_bounds = array<i64: 1, 4, 2, 128>}, {transform_indices = @transform_2, window_bounds = array<i64: 1, 2, 2, 128>}, {transform_indices = @transform_3, window_bounds = array<i64: 1, 4, 2, 128>}, {transform_indices = @transform_4, window_bounds = array<i64: 1, 4, 2, 128>}]} {
    %c0 = arith.constant 0 : index
    %0 = memref.load %arg2[%c0] : memref<4xf32, #tpu.memory_space<smem>>
    %c0_0 = arith.constant 0 : index
    %c0_1 = arith.constant 0 : index
    %c0_2 = arith.constant 0 : index
    %c0_3 = arith.constant 0 : index
    %1 = vector.load %arg3[%c0_0, %c0_1, %c0_2, %c0_3] : memref<1x4x2x128xf32, #tpu.memory_space<vmem>>, vector<1x4x2x128xf32>
    %2 = vector.broadcast %0 : f32 to vector<1x4x2x128xf32>
    %3 = arith.mulf %2, %1 : vector<1x4x2x128xf32>
    %c1 = arith.constant 1 : index
    %4 = memref.load %arg2[%c1] : memref<4xf32, #tpu.memory_space<smem>>
    %c0_4 = arith.constant 0 : index
    %c0_5 = arith.constant 0 : index
    %c0_6 = arith.constant 0 : index
    %c0_7 = arith.constant 0 : index
    %5 = vector.load %arg4[%c0_4, %c0_5, %c0_6, %c0_7] : memref<1x4x2x128xf32, #tpu.memory_space<vmem>>, vector<1x4x2x128xf32>
    %6 = vector.broadcast %4 : f32 to vector<1x4x2x128xf32>
    %7 = arith.mulf %6, %5 : vector<1x4x2x128xf32>
    %8 = arith.addf %3, %7 : vector<1x4x2x128xf32>
    %c2 = arith.constant 2 : index
    %9 = memref.load %arg2[%c2] : memref<4xf32, #tpu.memory_space<smem>>
    %c0_8 = arith.constant 0 : index
    %c0_9 = arith.constant 0 : index
    %c0_10 = arith.constant 0 : index
    %c0_11 = arith.constant 0 : index
    %10 = vector.load %arg5[%c0_8, %c0_9, %c0_10, %c0_11] : memref<1x2x2x128xf32, #tpu.memory_space<vmem>>, vector<1x2x2x128xf32>
    %11 = vector.broadcast %9 : f32 to vector<1x2x2x128xf32>
    %12 = arith.mulf %11, %10 : vector<1x2x2x128xf32>
    %13 = vector.extract_strided_slice %8 {offsets = [0, 0, 0, 0], sizes = [1, 2, 2, 128], strides = [1, 1, 1, 1]} : vector<1x4x2x128xf32> to vector<1x2x2x128xf32>
    %14 = arith.addf %13, %12 : vector<1x2x2x128xf32>
    %15 = vector.extract_strided_slice %8 {offsets = [0, 2, 0, 0], sizes = [1, 2, 2, 128], strides = [1, 1, 1, 1]} : vector<1x4x2x128xf32> to vector<1x2x2x128xf32>
    %16 = tpu.concatenate %14, %15 in 1 : vector<1x2x2x128xf32>, vector<1x2x2x128xf32> -> vector<1x4x2x128xf32>
    %c3 = arith.constant 3 : index
    %17 = memref.load %arg2[%c3] : memref<4xf32, #tpu.memory_space<smem>>
    %c0_12 = arith.constant 0 : index
    %c0_13 = arith.constant 0 : index
    %c0_14 = arith.constant 0 : index
    %c0_15 = arith.constant 0 : index
    %18 = vector.load %arg6[%c0_12, %c0_13, %c0_14, %c0_15] : memref<1x4x2x128xf32, #tpu.memory_space<vmem>>, vector<1x4x2x128xf32>
    %19 = vector.broadcast %17 : f32 to vector<1x4x2x128xf32>
    %20 = arith.mulf %19, %18 : vector<1x4x2x128xf32>
    %21 = arith.addf %16, %20 : vector<1x4x2x128xf32>
    %c0_16 = arith.constant 0 : index
    %c0_17 = arith.constant 0 : index
    %c0_18 = arith.constant 0 : index
    %c0_19 = arith.constant 0 : index
    %22 = vector.load %arg7[%c0_16, %c0_17, %c0_18, %c0_19] : memref<1x4x2x128xf32, #tpu.memory_space<vmem>>, vector<1x4x2x128xf32>
    tpu.vector_store %arg7[%c0_16, %c0_17, %c0_18, %c0_19], %21 {strides = array<i32>} : memref<1x4x2x128xf32, #tpu.memory_space<vmem>>, vector<1x4x2x128xf32>,
    return
  }
  func.func @transform_0(%arg0: i32, %arg1: i32, %arg2: memref<4xf32, #tpu.memory_space<smem>>) -> (i32, i32, i32, i32) {
    %c0_i32 = arith.constant 0 : i32
    %c0_i32_0 = arith.constant 0 : i32
    %c0_i32_1 = arith.constant 0 : i32
    return %arg0, %c0_i32, %arg1, %c0_i32_0 : i32, i32, i32, i32
  }
  func.func @transform_1(%arg0: i32, %arg1: i32, %arg2: memref<4xf32, #tpu.memory_space<smem>>) -> (i32, i32, i32, i32) {
    %c0_i32 = arith.constant 0 : i32
    %c0_i32_0 = arith.constant 0 : i32
    %c0_i32_1 = arith.constant 0 : i32
    return %arg0, %c0_i32, %arg1, %c0_i32_0 : i32, i32, i32, i32
  }
  func.func @transform_2(%arg0: i32, %arg1: i32, %arg2: memref<4xf32, #tpu.memory_space<smem>>) -> (i32, i32, i32, i32) {
    %c0_i32 = arith.constant 0 : i32
    %c0_i32_0 = arith.constant 0 : i32
    %c0_i32_1 = arith.constant 0 : i32
    return %arg0, %c0_i32, %arg1, %c0_i32_0 : i32, i32, i32, i32
  }
  func.func @transform_3(%arg0: i32, %arg1: i32, %arg2: memref<4xf32, #tpu.memory_space<smem>>) -> (i32, i32, i32, i32) {
    %c0_i32 = arith.constant 0 : i32
    %c0_i32_0 = arith.constant 0 : i32
    %c0_i32_1 = arith.constant 0 : i32
    return %arg0, %c0_i32, %arg1, %c0_i32_0 : i32, i32, i32, i32
  }
  func.func @transform_4(%arg0: i32, %arg1: i32, %arg2: memref<4xf32, #tpu.memory_space<smem>>) -> (i32, i32, i32, i32) {
    %c0_i32 = arith.constant 0 : i32
    %c0_i32_0 = arith.constant 0 : i32
    %c0_i32_1 = arith.constant 0 : i32
    return %arg0, %c0_i32, %arg1, %c0_i32_0 : i32, i32, i32, i32
  }
}

</mosaic_0001>

<llo_original>
// kernel: tpu_custom_call.1
$region0: #{tpu_custom_call.1}
  #allocation0 [shape = 'u32[]', space=smem, size = 0x4, offset = 0x4, fixed_abs, tag = 'smem constant byte address 0x4 - core index']
  #allocation1 [shape = 'u32[144,128]{1,0:T(1,128)}', space=vmem, size = 0x12000, scoped, tag = 'internal scratch']
  #allocation2 [shape = 's32[1]{0}', space=sflag, size = 0x4, scoped, tag = 'scoped memory for tpu_custom_call.1']
  #allocation3 [shape = 'u8[512]{0}', space=smem, size = 0x200, scoped, tag = 'prefetched SMEM operand 0']
  %s0 = inlined_call_operand.hbm [shape: f32[4], index: 0, kind: input, shape index: {}]
  %s1 = inlined_call_operand.hbm [shape: f32[2,4,2,128], index: 1, kind: input, shape index: {}]
  %s2 = inlined_call_operand.hbm [shape: f32[2,4,2,128], index: 2, kind: input, shape index: {}]
  %s3 = inlined_call_operand.hbm [shape: f32[2,2,2,128], index: 3, kind: input, shape index: {}]
  %s4 = inlined_call_operand.hbm [shape: f32[2,6,2,128], index: 4, kind: input, shape index: {}]
  %s5 = inlined_call_operand.hbm [shape: f32[2,4,2,128], index: 5, kind: output, shape index: {}]
  %s6 = sld [smem:[#allocation0]]
  $region65: #{tpu_custom_call.1} parent=0
    _
  %s8 = ssub.s32 1, %s6
  %s9 = scalar_select 0, %s8, %s6
  %11 = dma.hbm_to_smem %s0, 16, [#allocation3], [#allocation2]
  %12 = dma.done [#allocation2], 16
  %13 = sfence
  $region1: #{tpu_custom_call.1} parent=0
    #allocation4 [shape = 'u8[8192]{0}', space=vmem, size = 0x2000, scoped, tag = 'input window, operand 1']
    #allocation5 [shape = 's32[2]{0}', space=sflag, size = 0x8, scoped, tag = 'scoped memory for tpu_custom_call.1']
    #allocation6 [shape = 's32[2]{0}', space=sflag, size = 0x8, scoped, tag = 'scoped memory for tpu_custom_call.1']
    #allocation7 [shape = 'u8[8192]{0}', space=vmem, size = 0x2000, scoped, tag = 'input window, operand 2']
    #allocation8 [shape = 's32[2]{0}', space=sflag, size = 0x8, scoped, tag = 'scoped memory for tpu_custom_call.1']
    #allocation9 [shape = 'u8[4096]{0}', space=vmem, size = 0x1000, scoped, tag = 'input window, operand 3']
    #allocation10 [shape = 'u8[8192]{0}', space=vmem, size = 0x2000, scoped, tag = 'input window, operand 4']
    #allocation11 [shape = 's32[2]{0}', space=sflag, size = 0x8, scoped, tag = 'scoped memory for tpu_custom_call.1']
    #allocation12 [shape = 'u8[8192]{0}', space=vmem, size = 0x2000, scoped, tag = 'output window, operand 0']
    %14 = vsyncpa [#allocation5], 0
    %s15 = scalar_lea.sflag [#allocation5], 1
    %16 = vsyncpa %s15, 0
    %17 = vsyncpa [#allocation8], 0
    %s18 = scalar_lea.sflag [#allocation8], 1
    %19 = vsyncpa %s18, 0
    %20 = vsyncpa [#allocation11], 0
    %s21 = scalar_lea.sflag [#allocation11], 1
    %22 = vsyncpa %s21, 0
    %23 = vsyncpa [#allocation6], 0
    %s24 = scalar_lea.sflag [#allocation6], 1
    %25 = vsyncpa %s24, 0
    loop: start=0, step=1, limit=4
    $region2: #{tpu_custom_call.1} parent=1 // loop_pre_header
      _
    $region3: #{tpu_custom_call.1} parent=1 // loop_header
      %s27 = sphi 0, %s31
      %p28 = scmp.ge.s32.totalorder %s27, 4
      %s34 = sphi 0, %s46
      %s35 = sphi 0, %s42
      %s36 = sphi 0, %s34
      %s37 = sphi 0, %s35
      %s38 = sphi 0, %s36
      %s39 = sphi 0, %s37
      %s51 = sphi 0, %s53
      %s54 = sphi 0, %s51
      %s55 = sphi 0, %s54
      %s71 = sphi 0, %s55
      %s79 = sphi 0, %s81
      %s82 = sphi 0, %s79
      %s83 = sphi 0, %s82
      %s99 = sphi 0, %s83
      %s107 = sphi 0, %s109
      %s110 = sphi 0, %s107
      %s111 = sphi 0, %s110
      %s127 = sphi 0, %s111
      %s135 = sphi 0, %s137
      %s138 = sphi 0, %s135
      %s139 = sphi 0, %s138
      %s155 = sphi 0, %s139
      %s163 = sphi 0, %s165
      %s166 = sphi 0, %s163
      %s167 = sphi 0, %s166
      %s183 = sphi 0, %s167
    $region4: #{tpu_custom_call.1} parent=1 // loop_header_branch
      %30 = sbr.rel (%p28) target = $region8
    $region5: #{tpu_custom_call.1} parent=1 // loop_body
      %s32 = ssub.s32 %s27, 1
      %s33 = ssub.s32 %s27, 2
      %s40 = sadd.s32 1, %s35
      %p41 = scmp.ge.s32.totalorder %s40, 1
      %s42 = scalar_select %p41, 0, %s40
      %s43 = sadd.s32 1, %s34
      %s44 = scalar_select %p41, %s43, %s34
      %p45 = scmp.ge.s32.totalorder %s44, 2
      %s46 = scalar_select %p45, 0, %s44
      %s47 = ssub.s32 %s34, %s46
      %s48 = ssub.s32 %s35, %s42
      %s49 = sor.u32 %s47, %s48
      %p50 = scmp.eq.s32.totalorder %s49, 0
      %s52 = sadd.s32 %s51, 1
      %s53 = scalar_select %p50, %s51, %s52
      %p56 = pneg %p50
      %p57 = scmp.eq.s32.totalorder %s27, 1
      %p58 = por %p56, %p57
      %p59 = scmp.ne.s32.totalorder %s51, %s54
      %p60 = scmp.eq.s32.totalorder %s27, 0
      %p61 = por %p59, %p60
      %p62 = scmp.ne.s32.totalorder %s51, %s54
      %p63 = scmp.eq.s32.totalorder %s32, 1
      %p64 = por %p62, %p63
      %p65 = scmp.ne.s32.totalorder %s54, %s55
      %p66 = scmp.eq.s32.totalorder %s32, 0
      %p67 = por %p65, %p66
      %p68 = scmp.ne.s32.totalorder %s54, %s55
      %p69 = scmp.eq.s32.totalorder %s33, 1
      %p70 = por %p68, %p69
      %p72 = scmp.ne.s32.totalorder %s55, %s71
      %p73 = scmp.eq.s32.totalorder %s33, 0
      %p74 = por %p72, %p73
      %s75 = ssub.s32 %s34, %s46
      %s76 = ssub.s32 %s35, %s42
      %s77 = sor.u32 %s75, %s76
      %p78 = scmp.eq.s32.totalorder %s77, 0
      %s80 = sadd.s32 %s79, 1
      %s81 = scalar_select %p78, %s79, %s80
      %p84 = pneg %p78
      %p85 = scmp.eq.s32.totalorder %s27, 1
      %p86 = por %p84, %p85
      %p87 = scmp.ne.s32.totalorder %s79, %s82
      %p88 = scmp.eq.s32.totalorder %s27, 0
      %p89 = por %p87, %p88
      %p90 = scmp.ne.s32.totalorder %s79, %s82
      %p91 = scmp.eq.s32.totalorder %s32, 1
      %p92 = por %p90, %p91
      %p93 = scmp.ne.s32.totalorder %s82, %s83
      %p94 = scmp.eq.s32.totalorder %s32, 0
      %p95 = por %p93, %p94
      %p96 = scmp.ne.s32.totalorder %s82, %s83
      %p97 = scmp.eq.s32.totalorder %s33, 1
      %p98 = por %p96, %p97
      %p100 = scmp.ne.s32.totalorder %s83, %s99
      %p101 = scmp.eq.s32.totalorder %s33, 0
      %p102 = por %p100, %p101
      %s103 = ssub.s32 %s34, %s46
      %s104 = ssub.s32 %s35, %s42
      %s105 = sor.u32 %s103, %s104
      %p106 = scmp.eq.s32.totalorder %s105, 0
      %s108 = sadd.s32 %s107, 1
      %s109 = scalar_select %p106, %s107, %s108
      %p112 = pneg %p106
      %p113 = scmp.eq.s32.totalorder %s27, 1
      %p114 = por %p112, %p113
      %p115 = scmp.ne.s32.totalorder %s107, %s110
      %p116 = scmp.eq.s32.totalorder %s27, 0
      %p117 = por %p115, %p116
      %p118 = scmp.ne.s32.totalorder %s107, %s110
      %p119 = scmp.eq.s32.totalorder %s32, 1
      %p120 = por %p118, %p119
      %p121 = scmp.ne.s32.totalorder %s110, %s111
      %p122 = scmp.eq.s32.totalorder %s32, 0
      %p123 = por %p121, %p122
      %p124 = scmp.ne.s32.totalorder %s110, %s111
      %p125 = scmp.eq.s32.totalorder %s33, 1
      %p126 = por %p124, %p125
      %p128 = scmp.ne.s32.totalorder %s111, %s127
      %p129 = scmp.eq.s32.totalorder %s33, 0
      %p130 = por %p128, %p129
      %s131 = ssub.s32 %s34, %s46
      %s132 = ssub.s32 %s35, %s42
      %s133 = sor.u32 %s131, %s132
      %p134 = scmp.eq.s32.totalorder %s133, 0
      %s136 = sadd.s32 %s135, 1
      %s137 = scalar_select %p134, %s135, %s136
      %p140 = pneg %p134
      %p141 = scmp.eq.s32.totalorder %s27, 1
      %p142 = por %p140, %p141
      %p143 = scmp.ne.s32.totalorder %s135, %s138
      %p144 = scmp.eq.s32.totalorder %s27, 0
      %p145 = por %p143, %p144
      %p146 = scmp.ne.s32.totalorder %s135, %s138
      %p147 = scmp.eq.s32.totalorder %s32, 1
      %p148 = por %p146, %p147
      %p149 = scmp.ne.s32.totalorder %s138, %s139
      %p150 = scmp.eq.s32.totalorder %s32, 0
      %p151 = por %p149, %p150
      %p152 = scmp.ne.s32.totalorder %s138, %s139
      %p153 = scmp.eq.s32.totalorder %s33, 1
      %p154 = por %p152, %p153
      %p156 = scmp.ne.s32.totalorder %s139, %s155
      %p157 = scmp.eq.s32.totalorder %s33, 0
      %p158 = por %p156, %p157
      %s159 = ssub.s32 %s34, %s46
      %s160 = ssub.s32 %s35, %s42
      %s161 = sor.u32 %s159, %s160
      %p162 = scmp.eq.s32.totalorder %s161, 0
      %s164 = sadd.s32 %s163, 1
      %s165 = scalar_select %p162, %s163, %s164
      %p168 = pneg %p162
      %p169 = scmp.eq.s32.totalorder %s27, 1
      %p170 = por %p168, %p169
      %p171 = scmp.ne.s32.totalorder %s163, %s166
      %p172 = scmp.eq.s32.totalorder %s27, 0
      %p173 = por %p171, %p172
      %p174 = scmp.ne.s32.totalorder %s163, %s166
      %p175 = scmp.eq.s32.totalorder %s32, 1
      %p176 = por %p174, %p175
      %p177 = scmp.ne.s32.totalorder %s166, %s167
      %p178 = scmp.eq.s32.totalorder %s32, 0
      %p179 = por %p177, %p178
      %p180 = scmp.ne.s32.totalorder %s166, %s167
      %p181 = scmp.eq.s32.totalorder %s33, 1
      %p182 = por %p180, %p181
      %p184 = scmp.ne.s32.totalorder %s167, %s183
      %p185 = scmp.eq.s32.totalorder %s33, 0
      %p186 = por %p184, %p185
      %p187 = scmp.le.s32.totalorder 1, %s27
      %p188 = scmp.lt.s32.totalorder %s27, 3
      %p189 = pnand %p187, %p188
      %p190 = pneg %p189
      // Predicated region
      $region9: #{tpu_custom_call.1} parent=5 // pred_check
        _
      $region10: #{tpu_custom_call.1} parent=5 // pred_check_branch
        %192 = sbr.rel (%p189) target = $region12
      $region11: #{tpu_custom_call.1} parent=5 // pred_region
        %s193 = ssub.s32 %s27, 1
      $region12: #{tpu_custom_call.1} parent=5 // pred_fallthru
        _
      %p194 = scmp.lt.s32.totalorder %s27, 2
      // Predicated region
      $region13: #{tpu_custom_call.1} parent=5 // pred_check
        %p195 = pneg %p194
      $region14: #{tpu_custom_call.1} parent=5 // pred_check_branch
        %197 = sbr.rel (%p195) target = $region16
      $region15: #{tpu_custom_call.1} parent=5 // pred_region
        // Predicated region
        $region17: #{tpu_custom_call.1} parent=15 // pred_check
          %p198 = pneg %p61
        $region18: #{tpu_custom_call.1} parent=15 // pred_check_branch
          %200 = sbr.rel (%p198) target = $region20
        $region19: #{tpu_custom_call.1} parent=15 // pred_region
          %s201 = sand.u32 %s51, 1
          %s202 = scalar_lea.sflag [#allocation5], %s201
          %s203 = sand.u32 %s51, 1
          %s204 = smul.addr %s203, 8
          %s205 = scalar_lea.vmem [#allocation4], %s204
          %s207 = ssub.s32 128, 128
          %208 = vsyncadd %s202, %s207
          %s209 = smul.addr %s34, 4
          %s210 = sadd.s32 %s35, %s209
          %s211 = smul.addr %s210, 32
          %s212 = scalar_lea.hbm %s1, %s211
          %s213 = sshll.u32 %s205, 4
          %s214 = int_to_ptr.vmem [resolvable:$true] %s213
          %219 = dma.hbm_to_vmem [thread:$0]  %s212, 128, %s214, %s202, 32, 32, 2
        $region20: #{tpu_custom_call.1} parent=15 // pred_fallthru
          _
        // Predicated region
        $region21: #{tpu_custom_call.1} parent=15 // pred_check
          %p220 = pneg %p89
        $region22: #{tpu_custom_call.1} parent=15 // pred_check_branch
          %222 = sbr.rel (%p220) target = $region24
        $region23: #{tpu_custom_call.1} parent=15 // pred_region
          %s223 = sand.u32 %s27, 1
          %s224 = scalar_lea.sflag [#allocation8], %s223
          %s225 = sand.u32 %s79, 1
          %s226 = smul.addr %s225, 8
          %s227 = scalar_lea.vmem [#allocation7], %s226
          %s229 = ssub.s32 128, 128
          %230 = vsyncadd %s224, %s229
          %s231 = smul.addr %s34, 4
          %s232 = sadd.s32 %s35, %s231
          %s233 = smul.addr %s232, 32
          %s234 = scalar_lea.hbm %s2, %s233
          %s235 = sshll.u32 %s227, 4
          %s236 = int_to_ptr.vmem [resolvable:$true] %s235
          %241 = dma.hbm_to_vmem [thread:$0]  %s234, 128, %s236, %s224, 32, 32, 2
        $region24: #{tpu_custom_call.1} parent=15 // pred_fallthru
          _
        // Predicated region
        $region25: #{tpu_custom_call.1} parent=15 // pred_check
          %p242 = pneg %p117
        $region26: #{tpu_custom_call.1} parent=15 // pred_check_branch
          %244 = sbr.rel (%p242) target = $region28
        $region27: #{tpu_custom_call.1} parent=15 // pred_region
          %s245 = sand.u32 %s27, 1
          %s246 = scalar_lea.sflag [#allocation8], %s245
          %s247 = sand.u32 %s107, 1
          %s248 = smul.addr %s247, 4
          %s249 = scalar_lea.vmem [#allocation9], %s248
          %s251 = ssub.s32 64, 64
          %252 = vsyncadd %s246, %s251
          %s253 = smul.addr %s34, 2
          %s254 = sadd.s32 %s35, %s253
          %s255 = smul.addr %s254, 32
          %s256 = scalar_lea.hbm %s3, %s255
          %s257 = sshll.u32 %s249, 4
          %s258 = int_to_ptr.vmem [resolvable:$true] %s257
          %263 = dma.hbm_to_vmem [thread:$0]  %s256, 64, %s258, %s246, 32, 32, 2
        $region28: #{tpu_custom_call.1} parent=15 // pred_fallthru
          _
        // Predicated region
        $region29: #{tpu_custom_call.1} parent=15 // pred_check
          %p264 = pneg %p145
        $region30: #{tpu_custom_call.1} parent=15 // pred_check_branch
          %266 = sbr.rel (%p264) target = $region32
        $region31: #{tpu_custom_call.1} parent=15 // pred_region
          %s267 = sand.u32 %s135, 1
          %s268 = scalar_lea.sflag [#allocation11], %s267
          %s269 = sand.u32 %s135, 1
          %s270 = smul.addr %s269, 8
          %s271 = scalar_lea.vmem [#allocation10], %s270
          %s273 = ssub.s32 128, 128
          %274 = vsyncadd %s268, %s273
          %s275 = smul.addr %s34, 6
          %s276 = sadd.s32 %s35, %s275
          %s277 = smul.addr %s276, 32
          %s278 = scalar_lea.hbm %s4, %s277
          %s279 = sshll.u32 %s271, 4
          %s280 = int_to_ptr.vmem [resolvable:$true] %s279
          %285 = dma.hbm_to_vmem [thread:$0]  %s278, 128, %s280, %s268, 32, 32, 2
        $region32: #{tpu_custom_call.1} parent=15 // pred_fallthru
          _
      $region16: #{tpu_custom_call.1} parent=5 // pred_fallthru
        _
      %p286 = scmp.le.s32.totalorder 1, %s27
      %p287 = scmp.lt.s32.totalorder %s27, 3
      %p288 = pnand %p286, %p287
      %p289 = pneg %p288
      // Predicated region
      $region33: #{tpu_custom_call.1} parent=5 // pred_check
        _
      $region34: #{tpu_custom_call.1} parent=5 // pred_check_branch
        %291 = sbr.rel (%p288) target = $region36
      $region35: #{tpu_custom_call.1} parent=5 // pred_region
        %s292 = ssub.s32 %s27, 1
        %s293 = sand.u32 %s54, 1
        %s294 = scalar_lea.sflag [#allocation5], %s293
        %s295 = sand.u32 %s54, 1
        %s296 = smul.addr %s295, 8
        %s297 = scalar_lea.vmem [#allocation4], %s296
        // Predicated region
        $region37: #{tpu_custom_call.1} parent=35 // pred_check
          %p298 = pneg %p67
        $region38: #{tpu_custom_call.1} parent=35 // pred_check_branch
          %300 = sbr.rel (%p298) target = $region40
        $region39: #{tpu_custom_call.1} parent=35 // pred_region
          %301 = dma.done %s294, 128
        $region40: #{tpu_custom_call.1} parent=35 // pred_fallthru
          _
        %s302 = sand.u32 %s32, 1
        %s303 = scalar_lea.sflag [#allocation8], %s302
        %s304 = sand.u32 %s82, 1
        %s305 = smul.addr %s304, 8
        %s306 = scalar_lea.vmem [#allocation7], %s305
        // Predicated region
        $region41: #{tpu_custom_call.1} parent=35 // pred_check
          %p307 = pneg %p95
        $region42: #{tpu_custom_call.1} parent=35 // pred_check_branch
          %309 = sbr.rel (%p307) target = $region44
        $region43: #{tpu_custom_call.1} parent=35 // pred_region
          %310 = dma.done %s303, 128
        $region44: #{tpu_custom_call.1} parent=35 // pred_fallthru
          _
        %s311 = sand.u32 %s32, 1
        %s312 = scalar_lea.sflag [#allocation8], %s311
        %s313 = sand.u32 %s110, 1
        %s314 = smul.addr %s313, 4
        %s315 = scalar_lea.vmem [#allocation9], %s314
        // Predicated region
        $region45: #{tpu_custom_call.1} parent=35 // pred_check
          %p316 = pneg %p123
        $region46: #{tpu_custom_call.1} parent=35 // pred_check_branch
          %318 = sbr.rel (%p316) target = $region48
        $region47: #{tpu_custom_call.1} parent=35 // pred_region
          %319 = dma.done %s312, 64
        $region48: #{tpu_custom_call.1} parent=35 // pred_fallthru
          _
        %s320 = sand.u32 %s138, 1
        %s321 = scalar_lea.sflag [#allocation11], %s320
        %s322 = sand.u32 %s138, 1
        %s323 = smul.addr %s322, 8
        %s324 = scalar_lea.vmem [#allocation10], %s323
        // Predicated region
        $region49: #{tpu_custom_call.1} parent=35 // pred_check
          %p325 = pneg %p151
        $region50: #{tpu_custom_call.1} parent=35 // pred_check_branch
          %327 = sbr.rel (%p325) target = $region52
        $region51: #{tpu_custom_call.1} parent=35 // pred_region
          %328 = dma.done %s321, 128
        $region52: #{tpu_custom_call.1} parent=35 // pred_fallthru
          _
        %s329 = sand.u32 %s54, 1
        %s330 = scalar_lea.sflag [#allocation5], %s329
        %s331 = sand.u32 %s54, 1
        %s332 = smul.addr %s331, 8
        %s333 = scalar_lea.vmem [#allocation4], %s332
        %p334 = pneg %p67
        %p335 = pneg %p64
        %s336 = sand.u32 %s32, 1
        %s337 = scalar_lea.sflag [#allocation8], %s336
        %s338 = sand.u32 %s82, 1
        %s339 = smul.addr %s338, 8
        %s340 = scalar_lea.vmem [#allocation7], %s339
        %p341 = pneg %p95
        %p342 = pneg %p92
        %s343 = sand.u32 %s32, 1
        %s344 = scalar_lea.sflag [#allocation8], %s343
        %s345 = sand.u32 %s110, 1
        %s346 = smul.addr %s345, 4
        %s347 = scalar_lea.vmem [#allocation9], %s346
        %p348 = pneg %p123
        %p349 = pneg %p120
        %s350 = sand.u32 %s138, 1
        %s351 = scalar_lea.sflag [#allocation11], %s350
        %s352 = sand.u32 %s138, 1
        %s353 = smul.addr %s352, 8
        %s354 = scalar_lea.vmem [#allocation10], %s353
        %p355 = pneg %p151
        %p356 = pneg %p148
        %p357 = pneg %p179
        %p358 = pneg %p176
        %s359 = sand.u32 %s166, 1
        %s360 = scalar_lea.sflag [#allocation6], %s359
        %s361 = sand.u32 %s166, 1
        %s362 = smul.addr %s361, 8
        %s363 = scalar_lea.vmem [#allocation12], %s362
        %s364 = sld [smem:[#allocation3]]
        %v365 = vld [vmem:[%s297] sm:$0x3]
        %v366 = vld [vmem:[%s297 + $0x2] sm:$0x3]
        %v367 = vld [vmem:[%s297 + $0x4] sm:$0x3]
        %v368 = vld [vmem:[%s297 + $0x6] sm:$0x3]
        %v369 = vstv %s364
        %v370 = vmul.f32 %v369, %v365
        %v371 = vmul.f32 %v369, %v366
        %v372 = vmul.f32 %v369, %v367
        %v373 = vmul.f32 %v369, %v368
        %s374 = sld [smem:[#allocation3 + $0x1]]
        %v375 = vld [vmem:[%s306] sm:$0x3]
        %v376 = vld [vmem:[%s306 + $0x2] sm:$0x3]
        %v377 = vld [vmem:[%s306 + $0x4] sm:$0x3]
        %v378 = vld [vmem:[%s306 + $0x6] sm:$0x3]
        %v379 = vstv %s374
        %v380 = vmul.f32 %v379, %v375
        %v381 = vmul.f32 %v379, %v376
        %v382 = vmul.f32 %v379, %v377
        %v383 = vmul.f32 %v379, %v378
        %v384 = vadd.f32 %v370, %v380
        %v385 = vadd.f32 %v371, %v381
        %v386 = vadd.f32 %v372, %v382
        %v387 = vadd.f32 %v373, %v383
        %s388 = sld [smem:[#allocation3 + $0x2]]
        %v389 = vld [vmem:[%s315] sm:$0x3]
        %v390 = vld [vmem:[%s315 + $0x2] sm:$0x3]
        %v391 = vstv %s388
        %v392 = vmul.f32 %v391, %v389
        %v393 = vmul.f32 %v391, %v390
        %v394 = vadd.f32 %v384, %v392
        %v395 = vadd.f32 %v385, %v393
        %s396 = sld [smem:[#allocation3 + $0x3]]
        %v397 = vld [vmem:[%s324] sm:$0x3]
        %v398 = vld [vmem:[%s324 + $0x2] sm:$0x3]
        %v399 = vld [vmem:[%s324 + $0x4] sm:$0x3]
        %v400 = vld [vmem:[%s324 + $0x6] sm:$0x3]
        %v401 = vstv %s396
        %v402 = vmul.f32 %v401, %v397
        %v403 = vmul.f32 %v401, %v398
        %v404 = vmul.f32 %v401, %v399
        %v405 = vmul.f32 %v401, %v400
        %v406 = vadd.f32 %v394, %v402
        %v407 = vadd.f32 %v395, %v403
        %v408 = vadd.f32 %v386, %v404
        %v409 = vadd.f32 %v387, %v405
        %410 = vst [vmem:[%s363] sm:$0x3] %v406
        %411 = vst [vmem:[%s363 + $0x2] sm:$0x3] %v407
        %412 = vst [vmem:[%s363 + $0x4] sm:$0x3] %v408
        %413 = vst [vmem:[%s363 + $0x6] sm:$0x3] %v409
        %s414 = sand.u32 %s166, 1
        %s415 = scalar_lea.sflag [#allocation6], %s414
        %s416 = sand.u32 %s166, 1
        %s417 = smul.addr %s416, 8
        %s418 = scalar_lea.vmem [#allocation12], %s417
        // Predicated region
        $region53: #{tpu_custom_call.1} parent=35 // pred_check
          %p419 = pneg %p176
        $region54: #{tpu_custom_call.1} parent=35 // pred_check_branch
          %421 = sbr.rel (%p419) target = $region56
        $region55: #{tpu_custom_call.1} parent=35 // pred_region
          %s423 = ssub.s32 128, 128
          %424 = vsyncadd %s415, %s423
          %s425 = smul.addr %s36, 4
          %s426 = sadd.s32 %s37, %s425
          %s427 = smul.addr %s426, 32
          %s428 = scalar_lea.hbm %s5, %s427
          %s429 = sshll.u32 %s418, 4
          %s430 = int_to_ptr.vmem [resolvable:$true] %s429
          %435 = dma.vmem_to_hbm [thread:$0]  %s430, 128, %s428, %s415, 32, 32, 2
        $region56: #{tpu_custom_call.1} parent=35 // pred_fallthru
          _
      $region36: #{tpu_custom_call.1} parent=5 // pred_fallthru
        _
      %p436 = scmp.le.s32.totalorder 2, %s27
      // Predicated region
      $region57: #{tpu_custom_call.1} parent=5 // pred_check
        %p437 = pneg %p436
      $region58: #{tpu_custom_call.1} parent=5 // pred_check_branch
        %439 = sbr.rel (%p437) target = $region60
      $region59: #{tpu_custom_call.1} parent=5 // pred_region
        %s440 = ssub.s32 %s27, 2
        // Predicated region
        $region61: #{tpu_custom_call.1} parent=59 // pred_check
          %p441 = pneg %p182
        $region62: #{tpu_custom_call.1} parent=59 // pred_check_branch
          %443 = sbr.rel (%p441) target = $region64
        $region63: #{tpu_custom_call.1} parent=59 // pred_region
          %s444 = sand.u32 %s167, 1
          %s445 = scalar_lea.sflag [#allocation6], %s444
          %s446 = sand.u32 %s167, 1
          %s447 = smul.addr %s446, 8
          %s448 = scalar_lea.vmem [#allocation12], %s447
          %449 = dma.done %s445, 128
        $region64: #{tpu_custom_call.1} parent=59 // pred_fallthru
          _
      $region60: #{tpu_custom_call.1} parent=5 // pred_fallthru
        _
    $region6: #{tpu_custom_call.1} parent=1 // loop_footer
      %s31 = sadd.s32 1, %s27
    $region7: #{tpu_custom_call.1} parent=1 // loop_footer_branch
      %26 = sbr.rel target = $region3
    $region8: #{tpu_custom_call.1} parent=1 // loop_exit
      _
    %450 = vsyncpa [#allocation5], 1
    %s451 = scalar_lea.sflag [#allocation5], 1
    %452 = vsyncpa %s451, 1
    %453 = vsyncpa [#allocation8], 1
    %s454 = scalar_lea.sflag [#allocation8], 1
    %455 = vsyncpa %s454, 1
    %456 = vsyncpa [#allocation11], 1
    %s457 = scalar_lea.sflag [#allocation11], 1
    %458 = vsyncpa %s457, 1
    %459 = vsyncpa [#allocation6], 1
    %s460 = scalar_lea.sflag [#allocation6], 1
    %461 = vsyncpa %s460, 1

</llo_original>
